<compile_context>
chip_gen: v6e
topology: v6e:2x2x1
jax: 0.10.0
libtpu: 0.0.40
codegen_flags: <defaults>
</compile_context>

<pallas_src>
import jax
import jax.numpy as jnp
from jax.experimental import pallas as pl
from jax.experimental.pallas import tpu as pltpu


def _adv_net_kernel(x_ref, w1_ref, b1_ref, w2_ref, b2_ref, w3_ref, b3_ref, o_ref):
    # Layer 1: Linear -> ReLU  (dropout1 is identity at inference).
    h = jnp.dot(x_ref[...], w1_ref[...], preferred_element_type=jnp.float32)
    h = jnp.maximum(h + b1_ref[...], 0.0)
    # Layer 2: Linear -> ReLU  (dropout2 is identity at inference).
    h = jnp.dot(h.astype(jnp.bfloat16), w2_ref[...],
                preferred_element_type=jnp.float32)
    h = jnp.maximum(h + b2_ref[...], 0.0)
    # Layer 3: out_features == 1 -> keep it off the MXU.
    # VPU multiply + XLU lane reduction, scalar bias from SMEM, sigmoid on EUP.
    y = jnp.sum(h * w3_ref[...], axis=-1, keepdims=True) + b3_ref[0]
    o_ref[...] = jax.nn.sigmoid(y).astype(o_ref.dtype)


def adversarial_network_forward(x, params, *, tile_b=None):
    """Fused 3-layer MLP + sigmoid. x: [B, in_feature] float32 -> [B, 1] float32."""
    w1, b1, w2, b2, w3, b3 = params
    B, in_feature = x.shape
    h1 = w1.shape[1]
    h2 = w2.shape[1]

    # bf16 operands for the two MXU matmuls (f32 accumulation inside kernel).
    xb = x.astype(jnp.bfloat16)
    w1b = w1.astype(jnp.bfloat16)
    w2b = w2.astype(jnp.bfloat16)
    b1f = b1.astype(jnp.float32)
    b2f = b2.astype(jnp.float32)
    w3_row = w3.reshape(1, h2).astype(jnp.float32)   # used on the VPU, stays f32
    b3_s = b3.reshape(1).astype(jnp.float32)         # scalar bias -> SMEM

    # Batch tile: multiple of 8 sublanes; biggest tile that comfortably fits VMEM.
    if tile_b is None:
        tile_b = min(B, 512)
    tile_b = min(tile_b, B)
    if tile_b != B:
        assert tile_b % 8 == 0 and B % tile_b == 0, (
            "tile_b must be a multiple of 8 that divides B")
    grid = (pl.cdiv(B, tile_b),)

    # Advisory cost for XLA's scheduler around this custom call.
    flops = 2 * B * (in_feature * h1 + h1 * h2 + h2)
    bytes_accessed = (B * in_feature * 2            # x (bf16)
                      + in_feature * h1 * 2         # w1 (bf16)
                      + h1 * h2 * 2                 # w2 (bf16)
                      + (h1 + h2 + h2 + 1) * 4      # b1, b2, w3 row, b3 (f32)
                      + B * 1 * 4)                  # output (f32)
    cost = pl.CostEstimate(flops=flops, transcendentals=B,
                           bytes_accessed=bytes_accessed)

    def build(single_buffer_weights):
        def resident(shape):
            idx = lambda i: (0, 0)   # constant -> weights stay VMEM-resident
            if single_buffer_weights:
                # No "next" block ever needs prefetching -> one buffer suffices.
                return pl.BlockSpec(shape, idx, pipeline_mode=pl.Buffered(1))
            return pl.BlockSpec(shape, idx)

        grid_spec = pltpu.PrefetchScalarGridSpec(
            num_scalar_prefetch=0,
            grid=grid,
            in_specs=[
                pl.BlockSpec((tile_b, in_feature), lambda i: (i, 0)),   # x tile
                resident((in_feature, h1)),                             # W1
                resident((1, h1)),                                      # b1
                resident((h1, h2)),                                     # W2
                resident((1, h2)),                                      # b2
                resident((1, h2)),                                      # W3 row
                pl.BlockSpec(memory_space=pltpu.MemorySpace.SMEM),      # b3 scalar
            ],
            out_specs=pl.BlockSpec((tile_b, 1), lambda i: (i, 0)),
        )
        return pl.pallas_call(
            _adv_net_kernel,
            out_shape=jax.ShapeDtypeStruct((B, 1), jnp.float32),
            grid_spec=grid_spec,
            cost_estimate=cost,
            compiler_params=pltpu.CompilerParams(
                dimension_semantics=("parallel",),   # batch tiles are independent
                vmem_limit_bytes=32 * 1024 * 1024,   # explicit, safe on v5e/v6e/v7x
            ),
        )

    args = (xb, w1b, b1f, w2b, b2f, w3_row, b3_s)
    try:
        return build(single_buffer_weights=True)(*args)
    except Exception:
        # Fallback if this jax build rejects pl.Buffered(1) on resident operands.
        return build(single_buffer_weights=False)(*args)


def init_adversarial_network(key, in_feature, hidden_size1, hidden_size2):
    """Deterministic xavier-normal weights, zero biases (matches init_weights)."""
    k1, k2, k3 = jax.random.split(key, 3)

    def xavier_normal(k, fan_in, fan_out):
        std = jnp.sqrt(2.0 / (fan_in + fan_out))
        # stored as [in, out] (transposed relative to torch's [out, in])
        return std * jax.random.normal(k, (fan_in, fan_out), dtype=jnp.float32)

    w1 = xavier_normal(k1, in_feature, hidden_size1)
    b1 = jnp.zeros((1, hidden_size1), jnp.float32)
    w2 = xavier_normal(k2, hidden_size1, hidden_size2)
    b2 = jnp.zeros((1, hidden_size2), jnp.float32)
    w3 = xavier_normal(k3, hidden_size2, 1)
    b3 = jnp.zeros((1, 1), jnp.float32)
    return (w1, b1, w2, b2, w3, b3)


def _matched_reference(x, params):
    """Pure-JAX reference applying the same bf16 operand cast as the kernel."""
    w1, b1, w2, b2, w3, b3 = params
    h = jnp.dot(x.astype(jnp.bfloat16), w1.astype(jnp.bfloat16),
                preferred_element_type=jnp.float32)
    h = jnp.maximum(h + b1, 0.0)
    h = jnp.dot(h.astype(jnp.bfloat16), w2.astype(jnp.bfloat16),
                preferred_element_type=jnp.float32)
    h = jnp.maximum(h + b2, 0.0)
    y = jnp.dot(h, w3, preferred_element_type=jnp.float32) + b3
    return jax.nn.sigmoid(y)


def _f32_reference(x, params):
    w1, b1, w2, b2, w3, b3 = params
    h = jax.nn.relu(x @ w1 + b1)
    h = jax.nn.relu(h @ w2 + b2)
    return jax.nn.sigmoid(h @ w3 + b3)


if __name__ == "__main__":
    # TODO(synk): dropout (training mode) and the gradient-reversal hook affect
    # the training/backward path only; this kernel implements the inference
    # forward pass.
    B, IN_FEATURE, H1, H2 = 64, 32, 32, 16
    TILE_B = 16   # 4 grid steps -> exercises the batch-tile pipelining

    key = jax.random.PRNGKey(0)
    kx, kp = jax.random.split(key)
    x = jax.random.normal(kx, (B, IN_FEATURE), dtype=jnp.float32)
    params = init_adversarial_network(kp, IN_FEATURE, H1, H2)

    y = adversarial_network_forward(x, params, tile_b=TILE_B)
    y = jax.block_until_ready(y)
    assert y.shape == (B, 1)

    # Tight check vs a reference that uses the same bf16 operand rounding.
    y_ref = _matched_reference(x, params)
    assert jnp.allclose(y, y_ref, atol=1e-4, rtol=1e-4), (
        float(jnp.max(jnp.abs(y - y_ref))))
    # Loose check vs the pure-f32 reference (difference = bf16 operand rounding).
    y_f32 = _f32_reference(x, params)
    assert jnp.allclose(y, y_f32, atol=5e-2), float(jnp.max(jnp.abs(y - y_f32)))

    print("KERNEL_OK")
</pallas_src>

<mosaic_0001>
module attributes {stable_mosaic.version = 11 : i64} {
  func.func @_adv_net_kernel(%arg0: i32, %arg1: memref<16x32xbf16, #tpu.memory_space<vmem>>, %arg2: memref<32x32xbf16, #tpu.memory_space<vmem>>, %arg3: memref<1x32xf32, #tpu.memory_space<vmem>>, %arg4: memref<32x16xbf16, #tpu.memory_space<vmem>>, %arg5: memref<1x16xf32, #tpu.memory_space<vmem>>, %arg6: memref<1x16xf32, #tpu.memory_space<vmem>>, %arg7: memref<1xf32, #tpu.memory_space<smem>>, %arg8: memref<16x1xf32, #tpu.memory_space<vmem>>) attributes {dimension_semantics = [#tpu.dimension_semantics<parallel>], iteration_bounds = array<i64: 4>, scalar_prefetch = 0 : i64, scratch_operands = 0 : i64, tpu.core_type = #tpu.core_type<tc>, window_params = [{transform_indices = @transform_0, window_bounds = array<i64: 16, 32>}, {pipeline_mode = #tpu.pipeline_mode<synchronous>, transform_indices = @transform_1, window_bounds = array<i64: 32, 32>}, {pipeline_mode = #tpu.pipeline_mode<synchronous>, transform_indices = @transform_2, window_bounds = array<i64: 1, 32>}, {pipeline_mode = #tpu.pipeline_mode<synchronous>, transform_indices = @transform_3, window_bounds = array<i64: 32, 16>}, {pipeline_mode = #tpu.pipeline_mode<synchronous>, transform_indices = @transform_4, window_bounds = array<i64: 1, 16>}, {pipeline_mode = #tpu.pipeline_mode<synchronous>, transform_indices = @transform_5, window_bounds = array<i64: 1, 16>}, {transform_indices = @transform_6, window_bounds = array<i64: 1>}, {transform_indices = @transform_7, window_bounds = array<i64: 16, 1>}]} {
    %c0 = arith.constant 0 : index
    %c0_0 = arith.constant 0 : index
    %0 = vector.load %arg1[%c0, %c0_0] : memref<16x32xbf16, #tpu.memory_space<vmem>>, vector<16x32xbf16>
    %c0_1 = arith.constant 0 : index
    %c0_2 = arith.constant 0 : index
    %1 = vector.load %arg2[%c0_1, %c0_2] : memref<32x32xbf16, #tpu.memory_space<vmem>>, vector<32x32xbf16>
    %cst = arith.constant dense<0.000000e+00> : vector<16x32xf32>
    %2 = tpu.matmul %0, %1, %cst {dimension_numbers = #tpu.dot_dimension_numbers<[1], [0], [0], [1], [0, 0, 1, 1], [], []>} : vector<16x32xbf16>, vector<32x32xbf16>, vector<16x32xf32> -> vector<16x32xf32>
    %c0_3 = arith.constant 0 : index
    %c0_4 = arith.constant 0 : index
    %3 = vector.load %arg3[%c0_3, %c0_4] : memref<1x32xf32, #tpu.memory_space<vmem>>, vector<1x32xf32>
    %4 = vector.broadcast %3 : vector<1x32xf32> to vector<16x32xf32>
    %5 = arith.addf %2, %4 : vector<16x32xf32>
    %cst_5 = arith.constant 0.000000e+00 : f32
    %6 = vector.broadcast %cst_5 : f32 to vector<16x32xf32>
    %7 = arith.maximumf %5, %6 : vector<16x32xf32>
    %8 = arith.truncf %7 : vector<16x32xf32> to vector<16x32xbf16>
    %c0_6 = arith.constant 0 : index
    %c0_7 = arith.constant 0 : index
    %9 = vector.load %arg4[%c0_6, %c0_7] : memref<32x16xbf16, #tpu.memory_space<vmem>>, vector<32x16xbf16>
    %cst_8 = arith.constant dense<0.000000e+00> : vector<16x16xf32>
    %10 = tpu.matmul %8, %9, %cst_8 {dimension_numbers = #tpu.dot_dimension_numbers<[1], [0], [0], [1], [0, 0, 1, 1], [], []>} : vector<16x32xbf16>, vector<32x16xbf16>, vector<16x16xf32> -> vector<16x16xf32>
    %c0_9 = arith.constant 0 : index
    %c0_10 = arith.constant 0 : index
    %11 = vector.load %arg5[%c0_9, %c0_10] : memref<1x16xf32, #tpu.memory_space<vmem>>, vector<1x16xf32>
    %12 = vector.broadcast %11 : vector<1x16xf32> to vector<16x16xf32>
    %13 = arith.addf %10, %12 : vector<16x16xf32>
    %cst_11 = arith.constant 0.000000e+00 : f32
    %14 = vector.broadcast %cst_11 : f32 to vector<16x16xf32>
    %15 = arith.maximumf %13, %14 : vector<16x16xf32>
    %c0_12 = arith.constant 0 : index
    %c0_13 = arith.constant 0 : index
    %16 = vector.load %arg6[%c0_12, %c0_13] : memref<1x16xf32, #tpu.memory_space<vmem>>, vector<1x16xf32>
    %17 = vector.broadcast %16 : vector<1x16xf32> to vector<16x16xf32>
    %18 = arith.mulf %15, %17 : vector<16x16xf32>
    %cst_14 = arith.constant dense<0.000000e+00> : vector<16xf32>
    %19 = vector.multi_reduction <add>, %18, %cst_14 [1] : vector<16x16xf32> to vector<16xf32>
    %20 = vector.shape_cast %19 : vector<16xf32> to vector<16x1xf32>
    %c0_15 = arith.constant 0 : index
    %21 = memref.load %arg7[%c0_15] : memref<1xf32, #tpu.memory_space<smem>>
    %22 = vector.broadcast %21 : f32 to vector<16x1xf32>
    %23 = arith.addf %20, %22 : vector<16x1xf32>
    %24 = arith.negf %23 : vector<16x1xf32>
    %25 = math.exp %24 : vector<16x1xf32>
    %cst_16 = arith.constant 1.000000e+00 : f32
    %26 = vector.broadcast %cst_16 : f32 to vector<16x1xf32>
    %27 = arith.addf %26, %25 : vector<16x1xf32>
    %28 = arith.divf %26, %27 : vector<16x1xf32>
    %c0_17 = arith.constant 0 : index
    %c0_18 = arith.constant 0 : index
    %29 = vector.load %arg8[%c0_17, %c0_18] : memref<16x1xf32, #tpu.memory_space<vmem>>, vector<16x1xf32>
    tpu.vector_store %arg8[%c0_17, %c0_18], %28 {strides = array<i32>} : memref<16x1xf32, #tpu.memory_space<vmem>>, vector<16x1xf32>,
    return
  }
  func.func @transform_0(%arg0: i32) -> (i32, i32) {
    %c0_i32 = arith.constant 0 : i32
    %c0_i32_0 = arith.constant 0 : i32
    return %arg0, %c0_i32 : i32, i32
  }
  func.func @transform_1(%arg0: i32) -> (i32, i32) {
    %c0_i32 = arith.constant 0 : i32
    %c0_i32_0 = arith.constant 0 : i32
    %c0_i32_1 = arith.constant 0 : i32
    return %c0_i32, %c0_i32_0 : i32, i32
  }
  func.func @transform_2(%arg0: i32) -> (i32, i32) {
    %c0_i32 = arith.constant 0 : i32
    %c0_i32_0 = arith.constant 0 : i32
    %c0_i32_1 = arith.constant 0 : i32
    return %c0_i32, %c0_i32_0 : i32, i32
  }
  func.func @transform_3(%arg0: i32) -> (i32, i32) {
    %c0_i32 = arith.constant 0 : i32
    %c0_i32_0 = arith.constant 0 : i32
    %c0_i32_1 = arith.constant 0 : i32
    return %c0_i32, %c0_i32_0 : i32, i32
  }
  func.func @transform_4(%arg0: i32) -> (i32, i32) {
    %c0_i32 = arith.constant 0 : i32
    %c0_i32_0 = arith.constant 0 : i32
    %c0_i32_1 = arith.constant 0 : i32
    return %c0_i32, %c0_i32_0 : i32, i32
  }
  func.func @transform_5(%arg0: i32) -> (i32, i32) {
    %c0_i32 = arith.constant 0 : i32
    %c0_i32_0 = arith.constant 0 : i32
    %c0_i32_1 = arith.constant 0 : i32
    return %c0_i32, %c0_i32_0 : i32, i32
  }
  func.func @transform_6(%arg0: i32) -> i32 {
    %c0_i32 = arith.constant 0 : i32
    %c0_i32_0 = arith.constant 0 : i32
    return %c0_i32 : i32
  }
  func.func @transform_7(%arg0: i32) -> (i32, i32) {
    %c0_i32 = arith.constant 0 : i32
    %c0_i32_0 = arith.constant 0 : i32
    return %arg0, %c0_i32 : i32, i32
  }
}

module attributes {stable_mosaic.version = 11 : i64} {
  func.func @_adv_net_kernel(%arg0: i32, %arg1: memref<16x32xbf16, #tpu.memory_space<vmem>>, %arg2: memref<32x32xbf16, #tpu.memory_space<vmem>>, %arg3: memref<1x32xf32, #tpu.memory_space<vmem>>, %arg4: memref<32x16xbf16, #tpu.memory_space<vmem>>, %arg5: memref<1x16xf32, #tpu.memory_space<vmem>>, %arg6: memref<1x16xf32, #tpu.memory_space<vmem>>, %arg7: memref<1xf32, #tpu.memory_space<smem>>, %arg8: memref<16x1xf32, #tpu.memory_space<vmem>>) attributes {dimension_semantics = [#tpu.dimension_semantics<parallel>], iteration_bounds = array<i64: 4>, scalar_prefetch = 0 : i64, scratch_operands = 0 : i64, tpu.core_type = #tpu.core_type<tc>, window_params = [{transform_indices = @transform_0, window_bounds = array<i64: 16, 32>}, {pipeline_mode = #tpu.pipeline_mode<synchronous>, transform_indices = @transform_1, window_bounds = array<i64: 32, 32>}, {pipeline_mode = #tpu.pipeline_mode<synchronous>, transform_indices = @transform_2, window_bounds = array<i64: 1, 32>}, {pipeline_mode = #tpu.pipeline_mode<synchronous>, transform_indices = @transform_3, window_bounds = array<i64: 32, 16>}, {pipeline_mode = #tpu.pipeline_mode<synchronous>, transform_indices = @transform_4, window_bounds = array<i64: 1, 16>}, {pipeline_mode = #tpu.pipeline_mode<synchronous>, transform_indices = @transform_5, window_bounds = array<i64: 1, 16>}, {transform_indices = @transform_6, window_bounds = array<i64: 1>}, {transform_indices = @transform_7, window_bounds = array<i64: 16, 1>}]} {
    %c0 = arith.constant 0 : index
    %c0_0 = arith.constant 0 : index
    %0 = vector.load %arg1[%c0, %c0_0] : memref<16x32xbf16, #tpu.memory_space<vmem>>, vector<16x32xbf16>
    %c0_1 = arith.constant 0 : index
    %c0_2 = arith.constant 0 : index
    %1 = vector.load %arg2[%c0_1, %c0_2] : memref<32x32xbf16, #tpu.memory_space<vmem>>, vector<32x32xbf16>
    %cst = arith.constant dense<0.000000e+00> : vector<16x32xf32>
    %2 = tpu.matmul %0, %1, %cst {dimension_numbers = #tpu.dot_dimension_numbers<[1], [0], [0], [1], [0, 0, 1, 1], [], []>} : vector<16x32xbf16>, vector<32x32xbf16>, vector<16x32xf32> -> vector<16x32xf32>
    %c0_3 = arith.constant 0 : index
    %c0_4 = arith.constant 0 : index
    %3 = vector.load %arg3[%c0_3, %c0_4] : memref<1x32xf32, #tpu.memory_space<vmem>>, vector<1x32xf32>
    %4 = vector.broadcast %3 : vector<1x32xf32> to vector<16x32xf32>
    %5 = arith.addf %2, %4 : vector<16x32xf32>
    %cst_5 = arith.constant 0.000000e+00 : f32
    %6 = vector.broadcast %cst_5 : f32 to vector<16x32xf32>
    %7 = arith.maximumf %5, %6 : vector<16x32xf32>
    %8 = arith.truncf %7 : vector<16x32xf32> to vector<16x32xbf16>
    %c0_6 = arith.constant 0 : index
    %c0_7 = arith.constant 0 : index
    %9 = vector.load %arg4[%c0_6, %c0_7] : memref<32x16xbf16, #tpu.memory_space<vmem>>, vector<32x16xbf16>
    %cst_8 = arith.constant dense<0.000000e+00> : vector<16x16xf32>
    %10 = tpu.matmul %8, %9, %cst_8 {dimension_numbers = #tpu.dot_dimension_numbers<[1], [0], [0], [1], [0, 0, 1, 1], [], []>} : vector<16x32xbf16>, vector<32x16xbf16>, vector<16x16xf32> -> vector<16x16xf32>
    %c0_9 = arith.constant 0 : index
    %c0_10 = arith.constant 0 : index
    %11 = vector.load %arg5[%c0_9, %c0_10] : memref<1x16xf32, #tpu.memory_space<vmem>>, vector<1x16xf32>
    %12 = vector.broadcast %11 : vector<1x16xf32> to vector<16x16xf32>
    %13 = arith.addf %10, %12 : vector<16x16xf32>
    %cst_11 = arith.constant 0.000000e+00 : f32
    %14 = vector.broadcast %cst_11 : f32 to vector<16x16xf32>
    %15 = arith.maximumf %13, %14 : vector<16x16xf32>
    %c0_12 = arith.constant 0 : index
    %c0_13 = arith.constant 0 : index
    %16 = vector.load %arg6[%c0_12, %c0_13] : memref<1x16xf32, #tpu.memory_space<vmem>>, vector<1x16xf32>
    %17 = vector.broadcast %16 : vector<1x16xf32> to vector<16x16xf32>
    %18 = arith.mulf %15, %17 : vector<16x16xf32>
    %cst_14 = arith.constant dense<0.000000e+00> : vector<16xf32>
    %19 = vector.multi_reduction <add>, %18, %cst_14 [1] : vector<16x16xf32> to vector<16xf32>
    %20 = vector.shape_cast %19 : vector<16xf32> to vector<16x1xf32>
    %c0_15 = arith.constant 0 : index
    %21 = memref.load %arg7[%c0_15] : memref<1xf32, #tpu.memory_space<smem>>
    %22 = vector.broadcast %21 : f32 to vector<16x1xf32>
    %23 = arith.addf %20, %22 : vector<16x1xf32>
    %24 = arith.negf %23 : vector<16x1xf32>
    %25 = math.exp %24 : vector<16x1xf32>
    %cst_16 = arith.constant 1.000000e+00 : f32
    %26 = vector.broadcast %cst_16 : f32 to vector<16x1xf32>
    %27 = arith.addf %26, %25 : vector<16x1xf32>
    %28 = arith.divf %26, %27 : vector<16x1xf32>
    %c0_17 = arith.constant 0 : index
    %c0_18 = arith.constant 0 : index
    %29 = vector.load %arg8[%c0_17, %c0_18] : memref<16x1xf32, #tpu.memory_space<vmem>>, vector<16x1xf32>
    tpu.vector_store %arg8[%c0_17, %c0_18], %28 {strides = array<i32>} : memref<16x1xf32, #tpu.memory_space<vmem>>, vector<16x1xf32>,
    return
  }
  func.func @transform_0(%arg0: i32) -> (i32, i32) {
    %c0_i32 = arith.constant 0 : i32
    %c0_i32_0 = arith.constant 0 : i32
    return %arg0, %c0_i32 : i32, i32
  }
  func.func @transform_1(%arg0: i32) -> (i32, i32) {
    %c0_i32 = arith.constant 0 : i32
    %c0_i32_0 = arith.constant 0 : i32
    %c0_i32_1 = arith.constant 0 : i32
    return %c0_i32, %c0_i32_0 : i32, i32
  }
  func.func @transform_2(%arg0: i32) -> (i32, i32) {
    %c0_i32 = arith.constant 0 : i32
    %c0_i32_0 = arith.constant 0 : i32
    %c0_i32_1 = arith.constant 0 : i32
    return %c0_i32, %c0_i32_0 : i32, i32
  }
  func.func @transform_3(%arg0: i32) -> (i32, i32) {
    %c0_i32 = arith.constant 0 : i32
    %c0_i32_0 = arith.constant 0 : i32
    %c0_i32_1 = arith.constant 0 : i32
    return %c0_i32, %c0_i32_0 : i32, i32
  }
  func.func @transform_4(%arg0: i32) -> (i32, i32) {
    %c0_i32 = arith.constant 0 : i32
    %c0_i32_0 = arith.constant 0 : i32
    %c0_i32_1 = arith.constant 0 : i32
    return %c0_i32, %c0_i32_0 : i32, i32
  }
  func.func @transform_5(%arg0: i32) -> (i32, i32) {
    %c0_i32 = arith.constant 0 : i32
    %c0_i32_0 = arith.constant 0 : i32
    %c0_i32_1 = arith.constant 0 : i32
    return %c0_i32, %c0_i32_0 : i32, i32
  }
  func.func @transform_6(%arg0: i32) -> i32 {
    %c0_i32 = arith.constant 0 : i32
    %c0_i32_0 = arith.constant 0 : i32
    return %c0_i32 : i32
  }
  func.func @transform_7(%arg0: i32) -> (i32, i32) {
    %c0_i32 = arith.constant 0 : i32
    %c0_i32_0 = arith.constant 0 : i32
    return %arg0, %c0_i32 : i32, i32
  }
}

</mosaic_0001>

<llo_original>
// kernel: tpu_custom_call.1
$region0: #{tpu_custom_call.1}
  #allocation0 [shape = 'u32[]', space=smem, size = 0x4, offset = 0x4, fixed_abs, tag = 'smem constant byte address 0x4 - core index']
  #allocation1 [shape = 'u32[144,128]{1,0:T(1,128)}', space=vmem, size = 0x12000, scoped, tag = 'internal scratch']
  #allocation2 [shape = 'f32[1]{0:T(128)S(6)}', space=smem, size = 0x200, scoped, tag = 'scoped memory for tpu_custom_call.1']
  %s0 = inlined_call_operand.vmem [shape: bf16[64,32], index: 0, kind: input, shape index: {}]
  %s1 = inlined_call_operand.vmem [shape: bf16[32,32], index: 1, kind: input, shape index: {}]
  %s2 = inlined_call_operand.vmem [shape: f32[1,32], index: 2, kind: input, shape index: {}]
  %s3 = inlined_call_operand.vmem [shape: bf16[32,16], index: 3, kind: input, shape index: {}]
  %s4 = inlined_call_operand.vmem [shape: f32[1,16], index: 4, kind: input, shape index: {}]
  %s5 = inlined_call_operand.vmem [shape: f32[1,16], index: 5, kind: input, shape index: {}]
  %s6 = inlined_call_operand.<no memory space> [shape: f32[1], index: 6, kind: input, shape index: {}]
  %s7 = inlined_call_operand.vmem [shape: f32[64,1], index: 7, kind: output, shape index: {}]
  %s8 = sld [smem:[#allocation0]]
  $region61: #{tpu_custom_call.1} parent=0
    _
  %s10 = ssub.s32 1, %s8
  %s11 = scalar_select 0, %s10, %s8
  %12 = sst [smem:[#allocation2]] %s6
  loop: start=0, step=1, limit=6
  $region2: #{tpu_custom_call.1} parent=0 // loop_pre_header
    _
  $region3: #{tpu_custom_call.1} parent=0 // loop_header
    %s14 = sphi 0, %s18
    %p15 = scmp.ge.s32.totalorder %s14, 6
    %s24 = sphi 0, %s26
    %s27 = sphi 0, %s24
    %s28 = sphi 0, %s27
    %s44 = sphi 0, %s28
    %s48 = sphi 0, %s48
    %s50 = sphi 0, %s48
    %s51 = sphi 0, %s50
    %s65 = sphi 0, %s51
    %s69 = sphi 0, %s69
    %s71 = sphi 0, %s69
    %s72 = sphi 0, %s71
    %s86 = sphi 0, %s72
    %s90 = sphi 0, %s90
    %s92 = sphi 0, %s90
    %s93 = sphi 0, %s92
    %s107 = sphi 0, %s93
    %s111 = sphi 0, %s111
    %s113 = sphi 0, %s111
    %s114 = sphi 0, %s113
    %s128 = sphi 0, %s114
    %s132 = sphi 0, %s132
    %s134 = sphi 0, %s132
    %s135 = sphi 0, %s134
    %s149 = sphi 0, %s135
    %s153 = sphi 0, %s153
    %s155 = sphi 0, %s153
    %s156 = sphi 0, %s155
    %s170 = sphi 0, %s156
    %s176 = sphi 0, %s178
    %s179 = sphi 0, %s176
    %s180 = sphi 0, %s179
    %s196 = sphi 0, %s180
  $region4: #{tpu_custom_call.1} parent=0 // loop_header_branch
    %17 = sbr.rel (%p15) target = $region8
  $region5: #{tpu_custom_call.1} parent=0 // loop_body
    %s19 = ssub.s32 %s14, 1
    %s20 = ssub.s32 %s14, 2
    %s21 = sadd.s32 %s14, 1
    %s22 = ssub.s32 %s14, %s21
    %p23 = scmp.eq.s32.totalorder %s22, 0
    %s25 = sadd.s32 %s24, 1
    %s26 = scalar_select %p23, %s24, %s25
    %p29 = pneg %p23
    %p30 = scmp.eq.s32.totalorder %s14, 3
    %p31 = por %p29, %p30
    %p32 = scmp.ne.s32.totalorder %s24, %s27
    %p33 = scmp.eq.s32.totalorder %s14, 0
    %p34 = por %p32, %p33
    %p35 = scmp.ne.s32.totalorder %s24, %s27
    %p36 = scmp.eq.s32.totalorder %s19, 3
    %p37 = por %p35, %p36
    %p38 = scmp.ne.s32.totalorder %s27, %s28
    %p39 = scmp.eq.s32.totalorder %s19, 0
    %p40 = por %p38, %p39
    %p41 = scmp.ne.s32.totalorder %s27, %s28
    %p42 = scmp.eq.s32.totalorder %s20, 3
    %p43 = por %p41, %p42
    %p45 = scmp.ne.s32.totalorder %s28, %s44
    %p46 = scmp.eq.s32.totalorder %s20, 0
    %p47 = por %p45, %p46
    %s49 = sadd.s32 %s48, 1
    %p52 = scmp.eq.s32.totalorder %s14, 3
    %p53 = scmp.ne.s32.totalorder %s48, %s50
    %p54 = scmp.eq.s32.totalorder %s14, 0
    %p55 = por %p53, %p54
    %p56 = scmp.ne.s32.totalorder %s48, %s50
    %p57 = scmp.eq.s32.totalorder %s19, 3
    %p58 = por %p56, %p57
    %p59 = scmp.ne.s32.totalorder %s50, %s51
    %p60 = scmp.eq.s32.totalorder %s19, 0
    %p61 = por %p59, %p60
    %p62 = scmp.ne.s32.totalorder %s50, %s51
    %p63 = scmp.eq.s32.totalorder %s20, 3
    %p64 = por %p62, %p63
    %p66 = scmp.ne.s32.totalorder %s51, %s65
    %p67 = scmp.eq.s32.totalorder %s20, 0
    %p68 = por %p66, %p67
    %s70 = sadd.s32 %s69, 1
    %p73 = scmp.eq.s32.totalorder %s14, 3
    %p74 = scmp.ne.s32.totalorder %s69, %s71
    %p75 = scmp.eq.s32.totalorder %s14, 0
    %p76 = por %p74, %p75
    %p77 = scmp.ne.s32.totalorder %s69, %s71
    %p78 = scmp.eq.s32.totalorder %s19, 3
    %p79 = por %p77, %p78
    %p80 = scmp.ne.s32.totalorder %s71, %s72
    %p81 = scmp.eq.s32.totalorder %s19, 0
    %p82 = por %p80, %p81
    %p83 = scmp.ne.s32.totalorder %s71, %s72
    %p84 = scmp.eq.s32.totalorder %s20, 3
    %p85 = por %p83, %p84
    %p87 = scmp.ne.s32.totalorder %s72, %s86
    %p88 = scmp.eq.s32.totalorder %s20, 0
    %p89 = por %p87, %p88
    %s91 = sadd.s32 %s90, 1
    %p94 = scmp.eq.s32.totalorder %s14, 3
    %p95 = scmp.ne.s32.totalorder %s90, %s92
    %p96 = scmp.eq.s32.totalorder %s14, 0
    %p97 = por %p95, %p96
    %p98 = scmp.ne.s32.totalorder %s90, %s92
    %p99 = scmp.eq.s32.totalorder %s19, 3
    %p100 = por %p98, %p99
    %p101 = scmp.ne.s32.totalorder %s92, %s93
    %p102 = scmp.eq.s32.totalorder %s19, 0
    %p103 = por %p101, %p102
    %p104 = scmp.ne.s32.totalorder %s92, %s93
    %p105 = scmp.eq.s32.totalorder %s20, 3
    %p106 = por %p104, %p105
    %p108 = scmp.ne.s32.totalorder %s93, %s107
    %p109 = scmp.eq.s32.totalorder %s20, 0
    %p110 = por %p108, %p109
    %s112 = sadd.s32 %s111, 1
    %p115 = scmp.eq.s32.totalorder %s14, 3
    %p116 = scmp.ne.s32.totalorder %s111, %s113
    %p117 = scmp.eq.s32.totalorder %s14, 0
    %p118 = por %p116, %p117
    %p119 = scmp.ne.s32.totalorder %s111, %s113
    %p120 = scmp.eq.s32.totalorder %s19, 3
    %p121 = por %p119, %p120
    %p122 = scmp.ne.s32.totalorder %s113, %s114
    %p123 = scmp.eq.s32.totalorder %s19, 0
    %p124 = por %p122, %p123
    %p125 = scmp.ne.s32.totalorder %s113, %s114
    %p126 = scmp.eq.s32.totalorder %s20, 3
    %p127 = por %p125, %p126
    %p129 = scmp.ne.s32.totalorder %s114, %s128
    %p130 = scmp.eq.s32.totalorder %s20, 0
    %p131 = por %p129, %p130
    %s133 = sadd.s32 %s132, 1
    %p136 = scmp.eq.s32.totalorder %s14, 3
    %p137 = scmp.ne.s32.totalorder %s132, %s134
    %p138 = scmp.eq.s32.totalorder %s14, 0
    %p139 = por %p137, %p138
    %p140 = scmp.ne.s32.totalorder %s132, %s134
    %p141 = scmp.eq.s32.totalorder %s19, 3
    %p142 = por %p140, %p141
    %p143 = scmp.ne.s32.totalorder %s134, %s135
    %p144 = scmp.eq.s32.totalorder %s19, 0
    %p145 = por %p143, %p144
    %p146 = scmp.ne.s32.totalorder %s134, %s135
    %p147 = scmp.eq.s32.totalorder %s20, 3
    %p148 = por %p146, %p147
    %p150 = scmp.ne.s32.totalorder %s135, %s149
    %p151 = scmp.eq.s32.totalorder %s20, 0
    %p152 = por %p150, %p151
    %s154 = sadd.s32 %s153, 1
    %p157 = scmp.eq.s32.totalorder %s14, 3
    %p158 = scmp.ne.s32.totalorder %s153, %s155
    %p159 = scmp.eq.s32.totalorder %s14, 0
    %p160 = por %p158, %p159
    %p161 = scmp.ne.s32.totalorder %s153, %s155
    %p162 = scmp.eq.s32.totalorder %s19, 3
    %p163 = por %p161, %p162
    %p164 = scmp.ne.s32.totalorder %s155, %s156
    %p165 = scmp.eq.s32.totalorder %s19, 0
    %p166 = por %p164, %p165
    %p167 = scmp.ne.s32.totalorder %s155, %s156
    %p168 = scmp.eq.s32.totalorder %s20, 3
    %p169 = por %p167, %p168
    %p171 = scmp.ne.s32.totalorder %s156, %s170
    %p172 = scmp.eq.s32.totalorder %s20, 0
    %p173 = por %p171, %p172
    %s174 = ssub.s32 %s14, %s21
    %p175 = scmp.eq.s32.totalorder %s174, 0
    %s177 = sadd.s32 %s176, 1
    %s178 = scalar_select %p175, %s176, %s177
    %p181 = pneg %p175
    %p182 = scmp.eq.s32.totalorder %s14, 3
    %p183 = por %p181, %p182
    %p184 = scmp.ne.s32.totalorder %s176, %s179
    %p185 = scmp.eq.s32.totalorder %s14, 0
    %p186 = por %p184, %p185
    %p187 = scmp.ne.s32.totalorder %s176, %s179
    %p188 = scmp.eq.s32.totalorder %s19, 3
    %p189 = por %p187, %p188
    %p190 = scmp.ne.s32.totalorder %s179, %s180
    %p191 = scmp.eq.s32.totalorder %s19, 0
    %p192 = por %p190, %p191
    %p193 = scmp.ne.s32.totalorder %s179, %s180
    %p194 = scmp.eq.s32.totalorder %s20, 3
    %p195 = por %p193, %p194
    %p197 = scmp.ne.s32.totalorder %s180, %s196
    %p198 = scmp.eq.s32.totalorder %s20, 0
    %p199 = por %p197, %p198
    %p200 = scmp.le.s32.totalorder 1, %s14
    %p201 = scmp.lt.s32.totalorder %s14, 5
    %p202 = pnand %p200, %p201
    %p203 = pneg %p202
    // Predicated region
    $region9: #{tpu_custom_call.1} parent=5 // pred_check
      _
    $region10: #{tpu_custom_call.1} parent=5 // pred_check_branch
      %205 = sbr.rel (%p202) target = $region12
    $region11: #{tpu_custom_call.1} parent=5 // pred_region
      %s206 = ssub.s32 %s14, 1
      // Predicated region
      $region13: #{tpu_custom_call.1} parent=11 // pred_check
        %p207 = pneg %p61
      $region14: #{tpu_custom_call.1} parent=11 // pred_check_branch
        %209 = sbr.rel (%p207) target = $region16
      $region15: #{tpu_custom_call.1} parent=11 // pred_region
        _
      $region16: #{tpu_custom_call.1} parent=11 // pred_fallthru
        _
      // Predicated region
      $region17: #{tpu_custom_call.1} parent=11 // pred_check
        %p210 = pneg %p82
      $region18: #{tpu_custom_call.1} parent=11 // pred_check_branch
        %212 = sbr.rel (%p210) target = $region20
      $region19: #{tpu_custom_call.1} parent=11 // pred_region
        _
      $region20: #{tpu_custom_call.1} parent=11 // pred_fallthru
        _
      // Predicated region
      $region21: #{tpu_custom_call.1} parent=11 // pred_check
        %p213 = pneg %p103
      $region22: #{tpu_custom_call.1} parent=11 // pred_check_branch
        %215 = sbr.rel (%p213) target = $region24
      $region23: #{tpu_custom_call.1} parent=11 // pred_region
        _
      $region24: #{tpu_custom_call.1} parent=11 // pred_fallthru
        _
      // Predicated region
      $region25: #{tpu_custom_call.1} parent=11 // pred_check
        %p216 = pneg %p124
      $region26: #{tpu_custom_call.1} parent=11 // pred_check_branch
        %218 = sbr.rel (%p216) target = $region28
      $region27: #{tpu_custom_call.1} parent=11 // pred_region
        _
      $region28: #{tpu_custom_call.1} parent=11 // pred_fallthru
        _
      // Predicated region
      $region29: #{tpu_custom_call.1} parent=11 // pred_check
        %p219 = pneg %p145
      $region30: #{tpu_custom_call.1} parent=11 // pred_check_branch
        %221 = sbr.rel (%p219) target = $region32
      $region31: #{tpu_custom_call.1} parent=11 // pred_region
        _
      $region32: #{tpu_custom_call.1} parent=11 // pred_fallthru
        _
      // Predicated region
      $region33: #{tpu_custom_call.1} parent=11 // pred_check
        %p222 = pneg %p166
      $region34: #{tpu_custom_call.1} parent=11 // pred_check_branch
        %224 = sbr.rel (%p222) target = $region36
      $region35: #{tpu_custom_call.1} parent=11 // pred_region
        _
      $region36: #{tpu_custom_call.1} parent=11 // pred_fallthru
        _
    $region12: #{tpu_custom_call.1} parent=5 // pred_fallthru
      _
    %p225 = scmp.lt.s32.totalorder %s14, 4
    // Predicated region
    $region37: #{tpu_custom_call.1} parent=5 // pred_check
      %p226 = pneg %p225
    $region38: #{tpu_custom_call.1} parent=5 // pred_check_branch
      %228 = sbr.rel (%p226) target = $region40
    $region39: #{tpu_custom_call.1} parent=5 // pred_region
      // Predicated region
      $region41: #{tpu_custom_call.1} parent=39 // pred_check
        %p229 = pneg %p34
      $region42: #{tpu_custom_call.1} parent=39 // pred_check_branch
        %231 = sbr.rel (%p229) target = $region44
      $region43: #{tpu_custom_call.1} parent=39 // pred_region
        %s232 = smul.u32 2, %s14
        %p233 = scmp.lt.s32.totalorder %s232, 7
        %s234 = scalar_select %p233, %s232, 7
        %s235 = smul.addr %s234, 4
        %s236 = scalar_lea.vmem %s0, %s235
        %s237 = smul.u32 2, %s14
      $region44: #{tpu_custom_call.1} parent=39 // pred_fallthru
        _
    $region40: #{tpu_custom_call.1} parent=5 // pred_fallthru
      _
    %p238 = scmp.le.s32.totalorder 1, %s14
    %p239 = scmp.lt.s32.totalorder %s14, 5
    %p240 = pnand %p238, %p239
    %p241 = pneg %p240
    // Predicated region
    $region45: #{tpu_custom_call.1} parent=5 // pred_check
      _
    $region46: #{tpu_custom_call.1} parent=5 // pred_check_branch
      %243 = sbr.rel (%p240) target = $region48
    $region47: #{tpu_custom_call.1} parent=5 // pred_region
      %s244 = ssub.s32 %s14, 1
      %s245 = smul.u32 2, %s19
      %p246 = scmp.lt.s32.totalorder %s245, 7
      %s247 = scalar_select %p246, %s245, 7
      %s248 = smul.addr %s247, 4
      %s249 = scalar_lea.vmem %s0, %s248
      %p250 = pneg %p40
      %p251 = pneg %p37
      %p252 = pneg %p61
      %p253 = pneg %p58
      %p254 = pneg %p82
      %p255 = pneg %p79
      %p256 = pneg %p103
      %p257 = pneg %p100
      %p258 = pneg %p124
      %p259 = pneg %p121
      %p260 = pneg %p145
      %p261 = pneg %p142
      %p262 = pneg %p166
      %p263 = pneg %p163
      %p264 = pneg %p192
      %p265 = pneg %p189
      %s266 = smul.u32 2, %s19
      %p267 = scmp.lt.s32.totalorder %s266, 7
      %s268 = scalar_select %p267, %s266, 7
      %s269 = smul.addr %s268, 8
      %s270 = scalar_lea.vmem %s7, %s269
      %s271 = smul.u32 2, %s19
      %p272 = scmp.lt.s32.totalorder %s271, 7
      %s273 = scalar_select %p272, %s271, 7
      %s274 = smul.addr %s273, 4
      %s275 = scalar_lea.vmem %s0, %s274
      %s276 = smul.u32 2, %s19
      %s277 = smul.u32 2, %s19
      %p278 = scmp.lt.s32.totalorder %s277, 7
      %s279 = scalar_select %p278, %s277, 7
      %s280 = smul.addr %s279, 8
      %s281 = scalar_lea.vmem %s7, %s280
      %s282 = smul.u32 2, %s19
      %v284 = vld [vmem:[%s275] sm:$0xf]
      %v285 = vld [vmem:[%s275 + $0x4] sm:$0xf]
      %v286 = vld [vmem:[%s1] sm:$0xf]
      %v287 = vld [vmem:[%s1 + $0x4] sm:$0xf]
      %v288 = vld [vmem:[%s1 + $0x8] sm:$0xf]
      %v289 = vld [vmem:[%s1 + $0xc] sm:$0xf]
      %v290 = vld [vmem:[%s2] sm:$0x1]
      %v292 = vlaneseq
      %v293 = vshrl.u32 %v292, 7
      %v294 = vsub.s32 0, %v293
      %v295 = vrot.slane %v290, %v294
      %v299 = vunpack.c.l.b16 %v284
      %v300 = vunpack.c.l.b16 %v285
      %v301 = vpack.c.b16 %v300, %v299
      %v306 = vunpack.c.l.b16 %v286
      %v307 = vunpack.c.l.b16 %v287
      %v308 = vunpack.c.l.b16 %v288
      %v309 = vunpack.c.l.b16 %v289
      %v310 = vpack.c.b16 %v307, %v306
      %v311 = vpack.c.b16 %v309, %v308
      %vm314 = vcmask 261120
      %v316 = vsel %vm314, %v301, 0
      %318 = vmatprep.subr.bf16.mxu0 0
      %319 = vmatpush1.bf16.msra.mxu0 0
      %320 = vmatprep.subr.bf16.mxu0 0
      %321 = vmatpush1.bf16.msra.mxu0 0
      %322 = vmatprep.subr.bf16.mxu0 0
      %323 = vmatpush1.bf16.msra.mxu0 0
      %324 = vmatprep.subr.bf16.mxu0 0
      %325 = vmatpush1.bf16.msra.mxu0 0
      %326 = vmatprep.subr.bf16.mxu0 0
      %327 = vmatpush1.bf16.msra.mxu0 0
      %328 = vmatprep.subr.bf16.mxu0 0
      %329 = vmatpush1.bf16.msra.mxu0 0
      %330 = vmatprep.subr.bf16.mxu0 0
      %331 = vmatpush1.bf16.msra.mxu0 %v311
      %332 = vmatprep.subr.bf16.mxu0 0
      %333 = vmatpush1.bf16.msra.mxu0 %v310
      %334 = vmatprep.subr.bf16.mxu0 0
      %335 = vmatpush2.bf16.msra.mxu0 0
      %336 = vmatprep.subr.bf16.mxu0 0
      %337 = vmatpush2.bf16.msra.mxu0 0
      %338 = vmatprep.subr.bf16.mxu0 0
      %339 = vmatpush2.bf16.msra.mxu0 0
      %340 = vmatprep.subr.bf16.mxu0 0
      %341 = vmatpush2.bf16.msra.mxu0 0
      %342 = vmatprep.subr.bf16.mxu0 0
      %343 = vmatpush2.bf16.msra.mxu0 0
      %344 = vmatprep.subr.bf16.mxu0 0
      %345 = vmatpush2.bf16.msra.mxu0 0
      %346 = vmatprep.subr.bf16.mxu0 0
      %347 = vmatpush2.bf16.msra.mxu0 0
      %348 = vmatprep.subr.bf16.mxu0 0
      %349 = vmatpush2.bf16.msra.mxu0 0
      %350 = vmatprep.mubr.bf16.mxu0 0
      %351 = vmatmul.mubr.bf16.gmra.mxu0 %v316
      %v352 = vpop.f32.mrf.mxu0
      %v353 = vadd.f32 %v295, %v352
      %v354 = vpop.f32.mrf.mxu0
      %v355 = vpop.f32.mrf.mxu0
      %v356 = vadd.f32 %v295, %v355
      %v357 = vpop.f32.mrf.mxu0
      %358 = vdwg.mxu0
      %v359 = vmax.f32 %v353, 0.0
      %v360 = vmax.f32 %v356, 0.0
      %v361 = vpack.c.bf16 %v360, %v359
      %v362 = vld [vmem:[%s3] sm:$0xf]
      %v363 = vld [vmem:[%s3 + $0x4] sm:$0xf]
      %v364 = vld [vmem:[%s3 + $0x8] sm:$0xf]
      %v365 = vld [vmem:[%s3 + $0xc] sm:$0xf]
      %v366 = vld [vmem:[%s4] sm:$0x1]
      %v368 = vlaneseq
      %v369 = vshrl.u32 %v368, 7
      %v370 = vsub.s32 0, %v369
      %v371 = vrot.slane %v366, %v370
      %v377 = vunpack.c.l.b16 %v362
      %v378 = vunpack.c.l.b16 %v363
      %v379 = vunpack.c.l.b16 %v364
      %v380 = vunpack.c.l.b16 %v365
      %v381 = vpack.c.b16 %v378, %v377
      %v382 = vpack.c.b16 %v380, %v379
      %v386 = vsel %vm314, %v361, 0
      %388 = vmatprep.subr.bf16.mxu0 0
      %389 = vmatpush1.bf16.msra.mxu0 0
      %390 = vmatprep.subr.bf16.mxu0 0
      %391 = vmatpush1.bf16.msra.mxu0 0
      %392 = vmatprep.subr.bf16.mxu0 0
      %393 = vmatpush1.bf16.msra.mxu0 0
      %394 = vmatprep.subr.bf16.mxu0 0
      %395 = vmatpush1.bf16.msra.mxu0 0
      %396 = vmatprep.subr.bf16.mxu0 0
      %397 = vmatpush1.bf16.msra.mxu0 0
      %398 = vmatprep.subr.bf16.mxu0 0
      %399 = vmatpush1.bf16.msra.mxu0 0
      %400 = vmatprep.subr.bf16.mxu0 0
      %401 = vmatpush1.bf16.msra.mxu0 %v382
      %402 = vmatprep.subr.bf16.mxu0 0
      %403 = vmatpush1.bf16.msra.mxu0 %v381
      %404 = vmatprep.subr.bf16.mxu0 0
      %405 = vmatpush2.bf16.msra.mxu0 0
      %406 = vmatprep.subr.bf16.mxu0 0
      %407 = vmatpush2.bf16.msra.mxu0 0
      %408 = vmatprep.subr.bf16.mxu0 0
      %409 = vmatpush2.bf16.msra.mxu0 0
      %410 = vmatprep.subr.bf16.mxu0 0
      %411 = vmatpush2.bf16.msra.mxu0 0
      %412 = vmatprep.subr.bf16.mxu0 0
      %413 = vmatpush2.bf16.msra.mxu0 0
      %414 = vmatprep.subr.bf16.mxu0 0
      %415 = vmatpush2.bf16.msra.mxu0 0
      %416 = vmatprep.subr.bf16.mxu0 0
      %417 = vmatpush2.bf16.msra.mxu0 0
      %418 = vmatprep.subr.bf16.mxu0 0
      %419 = vmatpush2.bf16.msra.mxu0 0
      %420 = vmatprep.mubr.bf16.mxu0 0
      %421 = vmatmul.mubr.bf16.gmra.mxu0 %v386
      %v422 = vpop.f32.mrf.mxu0
      %v423 = vadd.f32 %v371, %v422
      %v424 = vpop.f32.mrf.mxu0
      %v425 = vpop.f32.mrf.mxu0
      %v426 = vadd.f32 %v371, %v425
      %v427 = vpop.f32.mrf.mxu0
      %428 = vdwg.mxu0
      %v429 = vmax.f32 %v423, 0.0
      %v430 = vmax.f32 %v426, 0.0
      %v431 = vld [vmem:[%s5] sm:$0x1]
      %v433 = vlaneseq
      %v434 = vshrl.u32 %v433, 7
      %v435 = vsub.s32 0, %v434
      %v436 = vrot.slane %v431, %v435
      %v438 = vmul.f32 %v429, %v436
      %v439 = vmul.f32 %v430, %v436
      %vm440 = vcmask 130048
      %v441 = vsel %vm440, %v438, 0.0
      %442 = vadd.xlane.f32.xlu0 %v441
      %v443 = vpop.xlane.xlu0 %442
      %v444 = vsel %vm440, %v439, 0.0
      %445 = vadd.xlane.f32.xlu0 %v444
      %v446 = vpop.xlane.xlu0 %445
      %s447 = sld [smem:[#allocation2]]
      %v448 = vstv %s447
      %v449 = vadd.f32 %v443, %v448
      %v450 = vadd.f32 %v446, %v448
      %v451 = vxor.u32 %v449, 2147483648
      %v452 = vxor.u32 %v450, 2147483648
      %v453 = vmul.f32 %v451, 1.442695
      %v454 = vpow.pop %v453
      %v455 = vmul.f32 %v452, 1.442695
      %v456 = vpow.pop %v455
      %v457 = vadd.f32 %v454, 1.0
      %v458 = vadd.f32 %v456, 1.0
      %v459 = vrcp.pop %v457
      %v460 = vmul.f32 1.0, %v459
      %v461 = vrcp.pop %v458
      %v462 = vmul.f32 1.0, %v461
      %vm463 = vcmask 7168
      %464 = vst.msk [vmem:[%s281] sm:$0xff] %vm463, %v460
      %465 = vst.msk [vmem:[%s281 + $0x8] sm:$0xff] %vm463, %v462
      %s466 = smul.u32 2, %s19
      %p467 = scmp.lt.s32.totalorder %s466, 7
      %s468 = scalar_select %p467, %s466, 7
      %s469 = smul.addr %s468, 8
      %s470 = scalar_lea.vmem %s7, %s469
      // Predicated region
      $region49: #{tpu_custom_call.1} parent=47 // pred_check
        %p471 = pneg %p189
      $region50: #{tpu_custom_call.1} parent=47 // pred_check_branch
        %473 = sbr.rel (%p471) target = $region52
      $region51: #{tpu_custom_call.1} parent=47 // pred_region
        %s474 = smul.u32 2, %s19
      $region52: #{tpu_custom_call.1} parent=47 // pred_fallthru
        _
    $region48: #{tpu_custom_call.1} parent=5 // pred_fallthru
      _
    %p475 = scmp.le.s32.totalorder 2, %s14
    // Predicated region
    $region53: #{tpu_custom_call.1} parent=5 // pred_check
      %p476 = pneg %p475
    $region54: #{tpu_custom_call.1} parent=5 // pred_check_branch
      %478 = sbr.rel (%p476) target = $region56
    $region55: #{tpu_custom_call.1} parent=5 // pred_region
      %s479 = ssub.s32 %s14, 2
      // Predicated region
      $region57: #{tpu_custom_call.1} parent=55 // pred_check
        %p480 = pneg %p195
      $region58: #{tpu_custom_call.1} parent=55 // pred_check_branch
        %482 = sbr.rel (%p480) target = $region60
      $region59: #{tpu_custom_call.1} parent=55 // pred_region
        %s483 = smul.u32 2, %s20
        %p484 = scmp.lt.s32.totalorder %s483, 7
        %s485 = scalar_select %p484, %s483, 7
        %s486 = smul.addr %s485, 8
        %s487 = scalar_lea.vmem %s7, %s486
      $region60: #{tpu_custom_call.1} parent=55 // pred_fallthru
        _
    $region56: #{tpu_custom_call.1} parent=5 // pred_fallthru
      _
  $region6: #{tpu_custom_call.1} parent=0 // loop_footer
    %s18 = sadd.s32 1, %s14
  $region7: #{tpu_custom_call.1} parent=0 // loop_footer_branch
    %13 = sbr.rel target = $region3
  $region8: #{tpu_custom_call.1} parent=0 // loop_exit
    _

// kernel: tpu_custom_call.1
$region0: #{tpu_custom_call.1}
  #allocation0 [shape = 'u32[]', space=smem, size = 0x4, offset = 0x4, fixed_abs, tag = 'smem constant byte address 0x4 - core index']
  #allocation1 [shape = 'u32[144,128]{1,0:T(1,128)}', space=vmem, size = 0x12000, scoped, tag = 'internal scratch']
  #allocation2 [shape = 'f32[1]{0:T(128)S(6)}', space=smem, size = 0x200, scoped, tag = 'scoped memory for tpu_custom_call.1']
  %s0 = inlined_call_operand.vmem [shape: bf16[64,32], index: 0, kind: input, shape index: {}]
  %s1 = inlined_call_operand.vmem [shape: bf16[32,32], index: 1, kind: input, shape index: {}]
  %s2 = inlined_call_operand.vmem [shape: f32[1,32], index: 2, kind: input, shape index: {}]
  %s3 = inlined_call_operand.vmem [shape: bf16[32,16], index: 3, kind: input, shape index: {}]
  %s4 = inlined_call_operand.vmem [shape: f32[1,16], index: 4, kind: input, shape index: {}]
  %s5 = inlined_call_operand.vmem [shape: f32[1,16], index: 5, kind: input, shape index: {}]
  %s6 = inlined_call_operand.<no memory space> [shape: f32[1], index: 6, kind: input, shape index: {}]
  %s7 = inlined_call_operand.vmem [shape: f32[64,1], index: 7, kind: output, shape index: {}]
  %s8 = sld [smem:[#allocation0]]
  $region61: #{tpu_custom_call.1} parent=0
    _
  %s10 = ssub.s32 1, %s8
  %s11 = scalar_select 0, %s10, %s8
  %12 = sst [smem:[#allocation2]] %s6
  loop: start=0, step=1, limit=6
  $region2: #{tpu_custom_call.1} parent=0 // loop_pre_header
    _
  $region3: #{tpu_custom_call.1} parent=0 // loop_header
    %s14 = sphi 0, %s18
    %p15 = scmp.ge.s32.totalorder %s14, 6
    %s24 = sphi 0, %s26
    %s27 = sphi 0, %s24
    %s28 = sphi 0, %s27
    %s44 = sphi 0, %s28
    %s48 = sphi 0, %s48
    %s50 = sphi 0, %s48
    %s51 = sphi 0, %s50
    %s65 = sphi 0, %s51
    %s69 = sphi 0, %s69
    %s71 = sphi 0, %s69
    %s72 = sphi 0, %s71
    %s86 = sphi 0, %s72
    %s90 = sphi 0, %s90
    %s92 = sphi 0, %s90
    %s93 = sphi 0, %s92
    %s107 = sphi 0, %s93
    %s111 = sphi 0, %s111
    %s113 = sphi 0, %s111
    %s114 = sphi 0, %s113
    %s128 = sphi 0, %s114
    %s132 = sphi 0, %s132
    %s134 = sphi 0, %s132
    %s135 = sphi 0, %s134
    %s149 = sphi 0, %s135
    %s153 = sphi 0, %s153
    %s155 = sphi 0, %s153
    %s156 = sphi 0, %s155
    %s170 = sphi 0, %s156
    %s176 = sphi 0, %s178
    %s179 = sphi 0, %s176
    %s180 = sphi 0, %s179
    %s196 = sphi 0, %s180
  $region4: #{tpu_custom_call.1} parent=0 // loop_header_branch
    %17 = sbr.rel (%p15) target = $region8
  $region5: #{tpu_custom_call.1} parent=0 // loop_body
    %s19 = ssub.s32 %s14, 1
    %s20 = ssub.s32 %s14, 2
    %s21 = sadd.s32 %s14, 1
    %s22 = ssub.s32 %s14, %s21
    %p23 = scmp.eq.s32.totalorder %s22, 0
    %s25 = sadd.s32 %s24, 1
    %s26 = scalar_select %p23, %s24, %s25
    %p29 = pneg %p23
    %p30 = scmp.eq.s32.totalorder %s14, 3
    %p31 = por %p29, %p30
    %p32 = scmp.ne.s32.totalorder %s24, %s27
    %p33 = scmp.eq.s32.totalorder %s14, 0
    %p34 = por %p32, %p33
    %p35 = scmp.ne.s32.totalorder %s24, %s27
    %p36 = scmp.eq.s32.totalorder %s19, 3
    %p37 = por %p35, %p36
    %p38 = scmp.ne.s32.totalorder %s27, %s28
    %p39 = scmp.eq.s32.totalorder %s19, 0
    %p40 = por %p38, %p39
    %p41 = scmp.ne.s32.totalorder %s27, %s28
    %p42 = scmp.eq.s32.totalorder %s20, 3
    %p43 = por %p41, %p42
    %p45 = scmp.ne.s32.totalorder %s28, %s44
    %p46 = scmp.eq.s32.totalorder %s20, 0
    %p47 = por %p45, %p46
    %s49 = sadd.s32 %s48, 1
    %p52 = scmp.eq.s32.totalorder %s14, 3
    %p53 = scmp.ne.s32.totalorder %s48, %s50
    %p54 = scmp.eq.s32.totalorder %s14, 0
    %p55 = por %p53, %p54
    %p56 = scmp.ne.s32.totalorder %s48, %s50
    %p57 = scmp.eq.s32.totalorder %s19, 3
    %p58 = por %p56, %p57
    %p59 = scmp.ne.s32.totalorder %s50, %s51
    %p60 = scmp.eq.s32.totalorder %s19, 0
    %p61 = por %p59, %p60
    %p62 = scmp.ne.s32.totalorder %s50, %s51
    %p63 = scmp.eq.s32.totalorder %s20, 3
    %p64 = por %p62, %p63
    %p66 = scmp.ne.s32.totalorder %s51, %s65
    %p67 = scmp.eq.s32.totalorder %s20, 0
    %p68 = por %p66, %p67
    %s70 = sadd.s32 %s69, 1
    %p73 = scmp.eq.s32.totalorder %s14, 3
    %p74 = scmp.ne.s32.totalorder %s69, %s71
    %p75 = scmp.eq.s32.totalorder %s14, 0
    %p76 = por %p74, %p75
    %p77 = scmp.ne.s32.totalorder %s69, %s71
    %p78 = scmp.eq.s32.totalorder %s19, 3
    %p79 = por %p77, %p78
    %p80 = scmp.ne.s32.totalorder %s71, %s72
    %p81 = scmp.eq.s32.totalorder %s19, 0
    %p82 = por %p80, %p81
    %p83 = scmp.ne.s32.totalorder %s71, %s72
    %p84 = scmp.eq.s32.totalorder %s20, 3
    %p85 = por %p83, %p84
    %p87 = scmp.ne.s32.totalorder %s72, %s86
    %p88 = scmp.eq.s32.totalorder %s20, 0
    %p89 = por %p87, %p88
    %s91 = sadd.s32 %s90, 1
    %p94 = scmp.eq.s32.totalorder %s14, 3
    %p95 = scmp.ne.s32.totalorder %s90, %s92
    %p96 = scmp.eq.s32.totalorder %s14, 0
    %p97 = por %p95, %p96
    %p98 = scmp.ne.s32.totalorder %s90, %s92
    %p99 = scmp.eq.s32.totalorder %s19, 3
    %p100 = por %p98, %p99
    %p101 = scmp.ne.s32.totalorder %s92, %s93
    %p102 = scmp.eq.s32.totalorder %s19, 0
    %p103 = por %p101, %p102
    %p104 = scmp.ne.s32.totalorder %s92, %s93
    %p105 = scmp.eq.s32.totalorder %s20, 3
    %p106 = por %p104, %p105
    %p108 = scmp.ne.s32.totalorder %s93, %s107
    %p109 = scmp.eq.s32.totalorder %s20, 0
    %p110 = por %p108, %p109
    %s112 = sadd.s32 %s111, 1
    %p115 = scmp.eq.s32.totalorder %s14, 3
    %p116 = scmp.ne.s32.totalorder %s111, %s113
    %p117 = scmp.eq.s32.totalorder %s14, 0
    %p118 = por %p116, %p117
    %p119 = scmp.ne.s32.totalorder %s111, %s113
    %p120 = scmp.eq.s32.totalorder %s19, 3
    %p121 = por %p119, %p120
    %p122 = scmp.ne.s32.totalorder %s113, %s114
    %p123 = scmp.eq.s32.totalorder %s19, 0
    %p124 = por %p122, %p123
    %p125 = scmp.ne.s32.totalorder %s113, %s114
    %p126 = scmp.eq.s32.totalorder %s20, 3
    %p127 = por %p125, %p126
    %p129 = scmp.ne.s32.totalorder %s114, %s128
    %p130 = scmp.eq.s32.totalorder %s20, 0
    %p131 = por %p129, %p130
    %s133 = sadd.s32 %s132, 1
    %p136 = scmp.eq.s32.totalorder %s14, 3
    %p137 = scmp.ne.s32.totalorder %s132, %s134
    %p138 = scmp.eq.s32.totalorder %s14, 0
    %p139 = por %p137, %p138
    %p140 = scmp.ne.s32.totalorder %s132, %s134
    %p141 = scmp.eq.s32.totalorder %s19, 3
    %p142 = por %p140, %p141
    %p143 = scmp.ne.s32.totalorder %s134, %s135
    %p144 = scmp.eq.s32.totalorder %s19, 0
    %p145 = por %p143, %p144
    %p146 = scmp.ne.s32.totalorder %s134, %s135
    %p147 = scmp.eq.s32.totalorder %s20, 3
    %p148 = por %p146, %p147
    %p150 = scmp.ne.s32.totalorder %s135, %s149
    %p151 = scmp.eq.s32.totalorder %s20, 0
    %p152 = por %p150, %p151
    %s154 = sadd.s32 %s153, 1
    %p157 = scmp.eq.s32.totalorder %s14, 3
    %p158 = scmp.ne.s32.totalorder %s153, %s155
    %p159 = scmp.eq.s32.totalorder %s14, 0
    %p160 = por %p158, %p159
    %p161 = scmp.ne.s32.totalorder %s153, %s155
    %p162 = scmp.eq.s32.totalorder %s19, 3
    %p163 = por %p161, %p162
    %p164 = scmp.ne.s32.totalorder %s155, %s156
    %p165 = scmp.eq.s32.totalorder %s19, 0
    %p166 = por %p164, %p165
    %p167 = scmp.ne.s32.totalorder %s155, %s156
    %p168 = scmp.eq.s32.totalorder %s20, 3
    %p169 = por %p167, %p168
    %p171 = scmp.ne.s32.totalorder %s156, %s170
    %p172 = scmp.eq.s32.totalorder %s20, 0
    %p173 = por %p171, %p172
    %s174 = ssub.s32 %s14, %s21
    %p175 = scmp.eq.s32.totalorder %s174, 0
    %s177 = sadd.s32 %s176, 1
    %s178 = scalar_select %p175, %s176, %s177
    %p181 = pneg %p175
    %p182 = scmp.eq.s32.totalorder %s14, 3
    %p183 = por %p181, %p182
    %p184 = scmp.ne.s32.totalorder %s176, %s179
    %p185 = scmp.eq.s32.totalorder %s14, 0
    %p186 = por %p184, %p185
    %p187 = scmp.ne.s32.totalorder %s176, %s179
    %p188 = scmp.eq.s32.totalorder %s19, 3
    %p189 = por %p187, %p188
    %p190 = scmp.ne.s32.totalorder %s179, %s180
    %p191 = scmp.eq.s32.totalorder %s19, 0
    %p192 = por %p190, %p191
    %p193 = scmp.ne.s32.totalorder %s179, %s180
    %p194 = scmp.eq.s32.totalorder %s20, 3
    %p195 = por %p193, %p194
    %p197 = scmp.ne.s32.totalorder %s180, %s196
    %p198 = scmp.eq.s32.totalorder %s20, 0
    %p199 = por %p197, %p198
    %p200 = scmp.le.s32.totalorder 1, %s14
    %p201 = scmp.lt.s32.totalorder %s14, 5
    %p202 = pnand %p200, %p201
    %p203 = pneg %p202
    // Predicated region
    $region9: #{tpu_custom_call.1} parent=5 // pred_check
      _
    $region10: #{tpu_custom_call.1} parent=5 // pred_check_branch
      %205 = sbr.rel (%p202) target = $region12
    $region11: #{tpu_custom_call.1} parent=5 // pred_region
      %s206 = ssub.s32 %s14, 1
      // Predicated region
      $region13: #{tpu_custom_call.1} parent=11 // pred_check
        %p207 = pneg %p61
      $region14: #{tpu_custom_call.1} parent=11 // pred_check_branch
        %209 = sbr.rel (%p207) target = $region16
      $region15: #{tpu_custom_call.1} parent=11 // pred_region
        _
      $region16: #{tpu_custom_call.1} parent=11 // pred_fallthru
        _
      // Predicated region
      $region17: #{tpu_custom_call.1} parent=11 // pred_check
        %p210 = pneg %p82
      $region18: #{tpu_custom_call.1} parent=11 // pred_check_branch
        %212 = sbr.rel (%p210) target = $region20
      $region19: #{tpu_custom_call.1} parent=11 // pred_region
        _
      $region20: #{tpu_custom_call.1} parent=11 // pred_fallthru
        _
      // Predicated region
      $region21: #{tpu_custom_call.1} parent=11 // pred_check
        %p213 = pneg %p103
      $region22: #{tpu_custom_call.1} parent=11 // pred_check_branch
        %215 = sbr.rel (%p213) target = $region24
      $region23: #{tpu_custom_call.1} parent=11 // pred_region
        _
      $region24: #{tpu_custom_call.1} parent=11 // pred_fallthru
        _
      // Predicated region
      $region25: #{tpu_custom_call.1} parent=11 // pred_check
        %p216 = pneg %p124
      $region26: #{tpu_custom_call.1} parent=11 // pred_check_branch
        %218 = sbr.rel (%p216) target = $region28
      $region27: #{tpu_custom_call.1} parent=11 // pred_region
        _
      $region28: #{tpu_custom_call.1} parent=11 // pred_fallthru
        _
      // Predicated region
      $region29: #{tpu_custom_call.1} parent=11 // pred_check
        %p219 = pneg %p145
      $region30: #{tpu_custom_call.1} parent=11 // pred_check_branch
        %221 = sbr.rel (%p219) target = $region32
      $region31: #{tpu_custom_call.1} parent=11 // pred_region
        _
      $region32: #{tpu_custom_call.1} parent=11 // pred_fallthru
        _
      // Predicated region
      $region33: #{tpu_custom_call.1} parent=11 // pred_check
        %p222 = pneg %p166
      $region34: #{tpu_custom_call.1} parent=11 // pred_check_branch
        %224 = sbr.rel (%p222) target = $region36
      $region35: #{tpu_custom_call.1} parent=11 // pred_region
        _
      $region36: #{tpu_custom_call.1} parent=11 // pred_fallthru
        _
    $region12: #{tpu_custom_call.1} parent=5 // pred_fallthru
      _
    %p225 = scmp.lt.s32.totalorder %s14, 4
    // Predicated region
    $region37: #{tpu_custom_call.1} parent=5 // pred_check
      %p226 = pneg %p225
    $region38: #{tpu_custom_call.1} parent=5 // pred_check_branch
      %228 = sbr.rel (%p226) target = $region40
    $region39: #{tpu_custom_call.1} parent=5 // pred_region
      // Predicated region
      $region41: #{tpu_custom_call.1} parent=39 // pred_check
        %p229 = pneg %p34
      $region42: #{tpu_custom_call.1} parent=39 // pred_check_branch
        %231 = sbr.rel (%p229) target = $region44
      $region43: #{tpu_custom_call.1} parent=39 // pred_region
        %s232 = smul.u32 2, %s14
        %p233 = scmp.lt.s32.totalorder %s232, 7
        %s234 = scalar_select %p233, %s232, 7
        %s235 = smul.addr %s234, 4
        %s236 = scalar_lea.vmem %s0, %s235
        %s237 = smul.u32 2, %s14
      $region44: #{tpu_custom_call.1} parent=39 // pred_fallthru
        _
    $region40: #{tpu_custom_call.1} parent=5 // pred_fallthru
      _
    %p238 = scmp.le.s32.totalorder 1, %s14
    %p239 = scmp.lt.s32.totalorder %s14, 5
    %p240 = pnand %p238, %p239
    %p241 = pneg %p240
    // Predicated region
    $region45: #{tpu_custom_call.1} parent=5 // pred_check
      _
    $region46: #{tpu_custom_call.1} parent=5 // pred_check_branch
      %243 = sbr.rel (%p240) target = $region48
    $region47: #{tpu_custom_call.1} parent=5 // pred_region
      %s244 = ssub.s32 %s14, 1
      %s245 = smul.u32 2, %s19
      %p246 = scmp.lt.s32.totalorder %s245, 7
      %s247 = scalar_select %p246, %s245, 7
      %s248 = smul.addr %s247, 4
      %s249 = scalar_lea.vmem %s0, %s248
      %p250 = pneg %p40
      %p251 = pneg %p37
      %p252 = pneg %p61
      %p253 = pneg %p58
      %p254 = pneg %p82
      %p255 = pneg %p79
      %p256 = pneg %p103
      %p257 = pneg %p100
      %p258 = pneg %p124
      %p259 = pneg %p121
      %p260 = pneg %p145
      %p261 = pneg %p142
      %p262 = pneg %p166
      %p263 = pneg %p163
      %p264 = pneg %p192
      %p265 = pneg %p189
      %s266 = smul.u32 2, %s19
      %p267 = scmp.lt.s32.totalorder %s266, 7
      %s268 = scalar_select %p267, %s266, 7
      %s269 = smul.addr %s268, 8
      %s270 = scalar_lea.vmem %s7, %s269
      %s271 = smul.u32 2, %s19
      %p272 = scmp.lt.s32.totalorder %s271, 7
      %s273 = scalar_select %p272, %s271, 7
      %s274 = smul.addr %s273, 4
      %s275 = scalar_lea.vmem %s0, %s274
      %s276 = smul.u32 2, %s19
      %s277 = smul.u32 2, %s19
      %p278 = scmp.lt.s32.totalorder %s277, 7
      %s279 = scalar_select %p278, %s277, 7
      %s280 = smul.addr %s279, 8
      %s281 = scalar_lea.vmem %s7, %s280
      %s282 = smul.u32 2, %s19
      %v284 = vld [vmem:[%s275] sm:$0xf]
      %v285 = vld [vmem:[%s275 + $0x4] sm:$0xf]
      %v286 = vld [vmem:[%s1] sm:$0xf]
      %v287 = vld [vmem:[%s1 + $0x4] sm:$0xf]
      %v288 = vld [vmem:[%s1 + $0x8] sm:$0xf]
      %v289 = vld [vmem:[%s1 + $0xc] sm:$0xf]
      %v290 = vld [vmem:[%s2] sm:$0x1]
      %v292 = vlaneseq
      %v293 = vshrl.u32 %v292, 7
      %v294 = vsub.s32 0, %v293
      %v295 = vrot.slane %v290, %v294
      %v299 = vunpack.c.l.b16 %v284
      %v300 = vunpack.c.l.b16 %v285
      %v301 = vpack.c.b16 %v300, %v299
      %v306 = vunpack.c.l.b16 %v286
      %v307 = vunpack.c.l.b16 %v287
      %v308 = vunpack.c.l.b16 %v288
      %v309 = vunpack.c.l.b16 %v289
      %v310 = vpack.c.b16 %v307, %v306
      %v311 = vpack.c.b16 %v309, %v308
      %vm314 = vcmask 261120
      %v316 = vsel %vm314, %v301, 0
      %318 = vmatprep.subr.bf16.mxu0 0
      %319 = vmatpush1.bf16.msra.mxu0 0
      %320 = vmatprep.subr.bf16.mxu0 0
      %321 = vmatpush1.bf16.msra.mxu0 0
      %322 = vmatprep.subr.bf16.mxu0 0
      %323 = vmatpush1.bf16.msra.mxu0 0
      %324 = vmatprep.subr.bf16.mxu0 0
      %325 = vmatpush1.bf16.msra.mxu0 0
      %326 = vmatprep.subr.bf16.mxu0 0
      %327 = vmatpush1.bf16.msra.mxu0 0
      %328 = vmatprep.subr.bf16.mxu0 0
      %329 = vmatpush1.bf16.msra.mxu0 0
      %330 = vmatprep.subr.bf16.mxu0 0
      %331 = vmatpush1.bf16.msra.mxu0 %v311
      %332 = vmatprep.subr.bf16.mxu0 0
      %333 = vmatpush1.bf16.msra.mxu0 %v310
      %334 = vmatprep.subr.bf16.mxu0 0
      %335 = vmatpush2.bf16.msra.mxu0 0
      %336 = vmatprep.subr.bf16.mxu0 0
      %337 = vmatpush2.bf16.msra.mxu0 0
      %338 = vmatprep.subr.bf16.mxu0 0
      %339 = vmatpush2.bf16.msra.mxu0 0
      %340 = vmatprep.subr.bf16.mxu0 0
      %341 = vmatpush2.bf16.msra.mxu0 0
      %342 = vmatprep.subr.bf16.mxu0 0
      %343 = vmatpush2.bf16.msra.mxu0 0
      %344 = vmatprep.subr.bf16.mxu0 0
      %345 = vmatpush2.bf16.msra.mxu0 0
      %346 = vmatprep.subr.bf16.mxu0 0
      %347 = vmatpush2.bf16.msra.mxu0 0
      %348 = vmatprep.subr.bf16.mxu0 0
      %349 = vmatpush2.bf16.msra.mxu0 0
      %350 = vmatprep.mubr.bf16.mxu0 0
      %351 = vmatmul.mubr.bf16.gmra.mxu0 %v316
      %v352 = vpop.f32.mrf.mxu0
      %v353 = vadd.f32 %v295, %v352
      %v354 = vpop.f32.mrf.mxu0
      %v355 = vpop.f32.mrf.mxu0
      %v356 = vadd.f32 %v295, %v355
      %v357 = vpop.f32.mrf.mxu0
      %358 = vdwg.mxu0
      %v359 = vmax.f32 %v353, 0.0
      %v360 = vmax.f32 %v356, 0.0
      %v361 = vpack.c.bf16 %v360, %v359
      %v362 = vld [vmem:[%s3] sm:$0xf]
      %v363 = vld [vmem:[%s3 + $0x4] sm:$0xf]
      %v364 = vld [vmem:[%s3 + $0x8] sm:$0xf]
      %v365 = vld [vmem:[%s3 + $0xc] sm:$0xf]
      %v366 = vld [vmem:[%s4] sm:$0x1]
      %v368 = vlaneseq
      %v369 = vshrl.u32 %v368, 7
      %v370 = vsub.s32 0, %v369
      %v371 = vrot.slane %v366, %v370
      %v377 = vunpack.c.l.b16 %v362
      %v378 = vunpack.c.l.b16 %v363
      %v379 = vunpack.c.l.b16 %v364
      %v380 = vunpack.c.l.b16 %v365
      %v381 = vpack.c.b16 %v378, %v377
      %v382 = vpack.c.b16 %v380, %v379
      %v386 = vsel %vm314, %v361, 0
      %388 = vmatprep.subr.bf16.mxu0 0
      %389 = vmatpush1.bf16.msra.mxu0 0
      %390 = vmatprep.subr.bf16.mxu0 0
      %391 = vmatpush1.bf16.msra.mxu0 0
      %392 = vmatprep.subr.bf16.mxu0 0
      %393 = vmatpush1.bf16.msra.mxu0 0
      %394 = vmatprep.subr.bf16.mxu0 0
      %395 = vmatpush1.bf16.msra.mxu0 0
      %396 = vmatprep.subr.bf16.mxu0 0
      %397 = vmatpush1.bf16.msra.mxu0 0
      %398 = vmatprep.subr.bf16.mxu0 0
      %399 = vmatpush1.bf16.msra.mxu0 0
      %400 = vmatprep.subr.bf16.mxu0 0
      %401 = vmatpush1.bf16.msra.mxu0 %v382
      %402 = vmatprep.subr.bf16.mxu0 0
      %403 = vmatpush1.bf16.msra.mxu0 %v381
      %404 = vmatprep.subr.bf16.mxu0 0
      %405 = vmatpush2.bf16.msra.mxu0 0
      %406 = vmatprep.subr.bf16.mxu0 0
      %407 = vmatpush2.bf16.msra.mxu0 0
      %408 = vmatprep.subr.bf16.mxu0 0
      %409 = vmatpush2.bf16.msra.mxu0 0
      %410 = vmatprep.subr.bf16.mxu0 0
      %411 = vmatpush2.bf16.msra.mxu0 0
      %412 = vmatprep.subr.bf16.mxu0 0
      %413 = vmatpush2.bf16.msra.mxu0 0
      %414 = vmatprep.subr.bf16.mxu0 0
      %415 = vmatpush2.bf16.msra.mxu0 0
      %416 = vmatprep.subr.bf16.mxu0 0
      %417 = vmatpush2.bf16.msra.mxu0 0
      %418 = vmatprep.subr.bf16.mxu0 0
      %419 = vmatpush2.bf16.msra.mxu0 0
      %420 = vmatprep.mubr.bf16.mxu0 0
      %421 = vmatmul.mubr.bf16.gmra.mxu0 %v386
      %v422 = vpop.f32.mrf.mxu0
      %v423 = vadd.f32 %v371, %v422
      %v424 = vpop.f32.mrf.mxu0
      %v425 = vpop.f32.mrf.mxu0
      %v426 = vadd.f32 %v371, %v425
      %v427 = vpop.f32.mrf.mxu0
      %428 = vdwg.mxu0
      %v429 = vmax.f32 %v423, 0.0
      %v430 = vmax.f32 %v426, 0.0
      %v431 = vld [vmem:[%s5] sm:$0x1]
      %v433 = vlaneseq
      %v434 = vshrl.u32 %v433, 7
      %v435 = vsub.s32 0, %v434
      %v436 = vrot.slane %v431, %v435
      %v438 = vmul.f32 %v429, %v436
      %v439 = vmul.f32 %v430, %v436
      %vm440 = vcmask 130048
      %v441 = vsel %vm440, %v438, 0.0
      %442 = vadd.xlane.f32.xlu0 %v441
      %v443 = vpop.xlane.xlu0 %442
      %v444 = vsel %vm440, %v439, 0.0
      %445 = vadd.xlane.f32.xlu0 %v444
      %v446 = vpop.xlane.xlu0 %445
      %s447 = sld [smem:[#allocation2]]
      %v448 = vstv %s447
      %v449 = vadd.f32 %v443, %v448
      %v450 = vadd.f32 %v446, %v448
      %v451 = vxor.u32 %v449, 2147483648
      %v452 = vxor.u32 %v450, 2147483648
      %v453 = vmul.f32 %v451, 1.442695
      %v454 = vpow.pop %v453
      %v455 = vmul.f32 %v452, 1.442695
      %v456 = vpow.pop %v455
      %v457 = vadd.f32 %v454, 1.0
      %v458 = vadd.f32 %v456, 1.0
      %v459 = vrcp.pop %v457
      %v460 = vmul.f32 1.0, %v459
      %v461 = vrcp.pop %v458
      %v462 = vmul.f32 1.0, %v461
      %vm463 = vcmask 7168
      %464 = vst.msk [vmem:[%s281] sm:$0xff] %vm463, %v460
      %465 = vst.msk [vmem:[%s281 + $0x8] sm:$0xff] %vm463, %v462
      %s466 = smul.u32 2, %s19
      %p467 = scmp.lt.s32.totalorder %s466, 7
      %s468 = scalar_select %p467, %s466, 7
      %s469 = smul.addr %s468, 8
      %s470 = scalar_lea.vmem %s7, %s469
      // Predicated region
      $region49: #{tpu_custom_call.1} parent=47 // pred_check
        %p471 = pneg %p189
      $region50: #{tpu_custom_call.1} parent=47 // pred_check_branch
        %473 = sbr.rel (%p471) target = $region52
      $region51: #{tpu_custom_call.1} parent=47 // pred_region
        %s474 = smul.u32 2, %s19
      $region52: #{tpu_custom_call.1} parent=47 // pred_fallthru
        _
    $region48: #{tpu_custom_call.1} parent=5 // pred_fallthru
      _
    %p475 = scmp.le.s32.totalorder 2, %s14
    // Predicated region
    $region53: #{tpu_custom_call.1} parent=5 // pred_check
      %p476 = pneg %p475
    $region54: #{tpu_custom_call.1} parent=5 // pred_check_branch
      %478 = sbr.rel (%p476) target = $region56
    $region55: #{tpu_custom_call.1} parent=5 // pred_region
      %s479 = ssub.s32 %s14, 2
      // Predicated region
      $region57: #{tpu_custom_call.1} parent=55 // pred_check
        %p480 = pneg %p195
      $region58: #{tpu_custom_call.1} parent=55 // pred_check_branch
        %482 = sbr.rel (%p480) target = $region60
      $region59: #{tpu_custom_call.1} parent=55 // pred_region
        %s483 = smul.u32 2, %s20
        %p484 = scmp.lt.s32.totalorder %s483, 7
        %s485 = scalar_select %p484, %s483, 7
        %s486 = smul.addr %s485, 8
        %s487 = scalar_lea.vmem %s7, %s486
      $region60: #{tpu_custom_call.1} parent=55 // pred_fallthru
        _
    $region56: #{tpu_custom_call.1} parent=5 // pred_fallthru
      _
  $region6: #{tpu_custom_call.1} parent=0 // loop_footer
    %s18 = sadd.s32 1, %s14
  $region7: #{tpu_custom_call.1} parent=0 // loop_footer_branch
    %13 = sbr.rel target = $region3
  $region8: #{tpu_custom_call.1} parent=0 // loop_exit
    _

</llo_original>
